<compile_context>
chip_gen: v5e
topology: v5e:2x2
jax: 0.10.0
libtpu: 0.0.40
codegen_flags: <defaults>
</compile_context>

<pallas_src>
import functools

import jax
import jax.numpy as jnp
from jax.experimental import pallas as pl
from jax.experimental.pallas import tpu as pltpu

# ---- synthetic model config (small, consistent with a transformer encoder) --
VOCAB = 100
MAXPOS = 16
HIDDEN = 32
HEADS = 2
HEAD_DIM = HIDDEN // HEADS
FFN = 64
EPS = 1e-12


# ------------------------------ in-kernel helpers -----------------------------
def _erf(x):
    # Abramowitz & Stegun 7.1.26 polynomial erf approximation (|err| < 1.5e-7).
    # Uses only mul/add/div/exp/abs/where, all with guaranteed Mosaic lowering
    # (lax.erf has no guaranteed Pallas-TPU rule).
    a1, a2, a3, a4, a5 = (0.254829592, -0.284496736, 1.421413741,
                          -1.453152027, 1.061405429)
    p = 0.3275911
    s = jnp.where(x < 0.0, -1.0, 1.0)
    z = jnp.abs(x)
    t = 1.0 / (1.0 + p * z)
    poly = ((((a5 * t + a4) * t + a3) * t + a2) * t + a1) * t
    return s * (1.0 - poly * jnp.exp(-z * z))


def _gelu_exact(x):
    # Exact (erf-form) GELU, matching HF/PyTorch nn.GELU default numerics.
    return 0.5 * x * (1.0 + _erf(x * 0.7071067811865476))


def _layernorm(x, g, b):
    mean = jnp.mean(x, axis=-1, keepdims=True)
    var = jnp.mean((x - mean) ** 2, axis=-1, keepdims=True)
    return (x - mean) * jax.lax.rsqrt(var + EPS) * g + b


# --------------------------- fused encoder kernel -----------------------------
def _encoder_kernel(h_ref, bias_ref,
                    ln_e_g_ref, ln_e_b_ref,
                    wqkv_ref, bqkv_ref,
                    wo_ref, bo_ref,
                    ln1_g_ref, ln1_b_ref,
                    w1_ref, b1_ref,
                    w2_ref, b2_ref,
                    ln2_g_ref, ln2_b_ref,
                    o_ref, *, scale):
    """One grid step = one batch element: full encoder block, weights in VMEM."""
    # Embedding LayerNorm.
    h = _layernorm(h_ref[...], ln_e_g_ref[...], ln_e_b_ref[...])          # (S, H)

    # Fused QKV projection: one MXU pass with 3*HIDDEN output lanes.
    qkv = jnp.dot(h, wqkv_ref[...],
                  preferred_element_type=jnp.float32) + bqkv_ref[...]     # (S, 3H)

    bias = bias_ref[...]                                                  # (1, S)

    # Multi-head SDPA, all heads in this single grid step (static unroll over
    # HEADS; contiguous lane slices; no explicit k transpose).
    kt_dims = (((1,), (1,)), ((), ()))       # contract last dims: q @ k^T
    ctx_heads = []
    for hd in range(HEADS):
        q_h = qkv[:, hd * HEAD_DIM:(hd + 1) * HEAD_DIM]
        k_h = qkv[:, HIDDEN + hd * HEAD_DIM:HIDDEN + (hd + 1) * HEAD_DIM]
        v_h = qkv[:, 2 * HIDDEN + hd * HEAD_DIM:2 * HIDDEN + (hd + 1) * HEAD_DIM]
        s = jax.lax.dot_general(q_h, k_h, kt_dims,
                                preferred_element_type=jnp.float32) * scale  # (S, S)
        s = s + bias                          # broadcast key mask over query rows
        s = s - jnp.max(s, axis=-1, keepdims=True)
        p = jnp.exp(s)
        p = p * pl.reciprocal(jnp.sum(p, axis=-1, keepdims=True), approx=True)
        ctx_heads.append(jnp.dot(p, v_h, preferred_element_type=jnp.float32))
    ctx = jnp.concatenate(ctx_heads, axis=-1)                             # (S, H)

    # Output projection + residual + LayerNorm.
    attn_out = jnp.dot(ctx, wo_ref[...],
                       preferred_element_type=jnp.float32) + bo_ref[...]
    h = _layernorm(h + attn_out, ln1_g_ref[...], ln1_b_ref[...])

    # Feed-forward (exact erf GELU) + residual + LayerNorm.
    f = jnp.dot(h, w1_ref[...], preferred_element_type=jnp.float32) + b1_ref[...]
    f = _gelu_exact(f)
    f = jnp.dot(f, w2_ref[...], preferred_element_type=jnp.float32) + b2_ref[...]
    o_ref[...] = _layernorm(h + f, ln2_g_ref[...], ln2_b_ref[...])


# ------------------------- deterministic parameters ---------------------------
def init_params(key):
    ks = jax.random.split(key, 8)

    def norm(k, shape, scale=0.02):
        return (scale * jax.random.normal(k, shape)).astype(jnp.float32)

    zeros = lambda o: jnp.zeros((1, o), jnp.float32)
    ones = lambda o: jnp.ones((1, o), jnp.float32)
    return {
        "tok_emb": norm(ks[0], (VOCAB, HIDDEN)),
        "pos_emb": norm(ks[1], (MAXPOS, HIDDEN)),
        "ln_emb_g": ones(HIDDEN), "ln_emb_b": zeros(HIDDEN),
        "wqkv": norm(ks[2], (HIDDEN, 3 * HIDDEN)), "bqkv": zeros(3 * HIDDEN),
        "wo": norm(ks[3], (HIDDEN, HIDDEN)), "bo": zeros(HIDDEN),
        "ln1_g": ones(HIDDEN), "ln1_b": zeros(HIDDEN),
        "w1": norm(ks[4], (HIDDEN, FFN)), "b1": zeros(FFN),
        "w2": norm(ks[5], (FFN, HIDDEN)), "b2": zeros(HIDDEN),
        "ln2_g": ones(HIDDEN), "ln2_b": zeros(HIDDEN),
    }


# ------------------------------- forward pass ---------------------------------
def forward(params, input_ids, attention_mask):
    """Mirrors Pooling.forward: returns last_hidden_state (B, S, HIDDEN)."""
    bsz, seq = input_ids.shape

    # Glue: embedding gather + position add (tiny XLA ops) and the precomputed
    # additive key-mask bias. Everything else runs inside one fused kernel.
    h = jnp.take(params["tok_emb"], input_ids, axis=0) \
        + params["pos_emb"][:seq][None, :, :]                          # (B, S, H)
    bias = ((1.0 - attention_mask.astype(jnp.float32)) * -1e9
            ).reshape(bsz, 1, seq)                                     # (B, 1, S)

    kernel = functools.partial(_encoder_kernel, scale=1.0 / (HEAD_DIM ** 0.5))
    wspec = lambda shape: pl.BlockSpec(shape, lambda b, _s=shape: (0,) * len(_s))

    out = pl.pallas_call(
        kernel,
        out_shape=jax.ShapeDtypeStruct((bsz, seq, HIDDEN), jnp.float32),
        grid=(bsz,),
        in_specs=[
            pl.BlockSpec((None, seq, HIDDEN), lambda b: (b, 0, 0)),     # h
            pl.BlockSpec((None, 1, seq), lambda b: (b, 0, 0)),          # mask bias
            wspec((1, HIDDEN)), wspec((1, HIDDEN)),                     # ln_emb g,b
            wspec((HIDDEN, 3 * HIDDEN)), wspec((1, 3 * HIDDEN)),        # wqkv,bqkv
            wspec((HIDDEN, HIDDEN)), wspec((1, HIDDEN)),                # wo,bo
            wspec((1, HIDDEN)), wspec((1, HIDDEN)),                     # ln1 g,b
            wspec((HIDDEN, FFN)), wspec((1, FFN)),                      # w1,b1
            wspec((FFN, HIDDEN)), wspec((1, HIDDEN)),                   # w2,b2
            wspec((1, HIDDEN)), wspec((1, HIDDEN)),                     # ln2 g,b
        ],
        out_specs=pl.BlockSpec((None, seq, HIDDEN), lambda b: (b, 0, 0)),
        compiler_params=pltpu.CompilerParams(
            dimension_semantics=("parallel",)),                         # megacore
    )(h, bias,
      params["ln_emb_g"], params["ln_emb_b"],
      params["wqkv"], params["bqkv"],
      params["wo"], params["bo"],
      params["ln1_g"], params["ln1_b"],
      params["w1"], params["b1"],
      params["w2"], params["b2"],
      params["ln2_g"], params["ln2_b"])
    return out


# TODO(synk): tokenizer / HuggingFace checkpoint loading and the encode()
# host-side sorting/batching have no Pallas equivalent; only forward() is
# implemented as a kernel (the embedding gather stays as a tiny XLA op).

if __name__ == "__main__":
    key = jax.random.PRNGKey(0)
    pkey, ikey = jax.random.split(key)
    params = init_params(pkey)

    B, S = 2, 8
    input_ids = jax.random.randint(ikey, (B, S), 0, VOCAB, dtype=jnp.int32)
    attention_mask = jnp.ones((B, S), dtype=jnp.int32).at[1, 6:].set(0)

    out = jax.jit(forward)(params, input_ids, attention_mask)
    jax.block_until_ready(out)
    assert out.shape == (B, S, HIDDEN) and out.dtype == jnp.float32
    print("KERNEL_OK")
</pallas_src>

<mosaic_0001>
module attributes {stable_mosaic.version = 11 : i64} {
  func.func @_encoder_kernel(%arg0: i32, %arg1: memref<1x8x32xf32, #tpu.memory_space<vmem>>, %arg2: memref<1x1x8xf32, #tpu.memory_space<vmem>>, %arg3: memref<1x32xf32, #tpu.memory_space<vmem>>, %arg4: memref<1x32xf32, #tpu.memory_space<vmem>>, %arg5: memref<32x96xf32, #tpu.memory_space<vmem>>, %arg6: memref<1x96xf32, #tpu.memory_space<vmem>>, %arg7: memref<32x32xf32, #tpu.memory_space<vmem>>, %arg8: memref<1x32xf32, #tpu.memory_space<vmem>>, %arg9: memref<1x32xf32, #tpu.memory_space<vmem>>, %arg10: memref<1x32xf32, #tpu.memory_space<vmem>>, %arg11: memref<32x64xf32, #tpu.memory_space<vmem>>, %arg12: memref<1x64xf32, #tpu.memory_space<vmem>>, %arg13: memref<64x32xf32, #tpu.memory_space<vmem>>, %arg14: memref<1x32xf32, #tpu.memory_space<vmem>>, %arg15: memref<1x32xf32, #tpu.memory_space<vmem>>, %arg16: memref<1x32xf32, #tpu.memory_space<vmem>>, %arg17: memref<1x8x32xf32, #tpu.memory_space<vmem>>) attributes {dimension_semantics = [#tpu.dimension_semantics<parallel>], iteration_bounds = array<i64: 2>, scalar_prefetch = 0 : i64, scratch_operands = 0 : i64, tpu.core_type = #tpu.core_type<tc>, window_params = [{transform_indices = @transform_0, window_bounds = array<i64: 1, 8, 32>}, {transform_indices = @transform_1, window_bounds = array<i64: 1, 1, 8>}, {pipeline_mode = #tpu.pipeline_mode<synchronous>, transform_indices = @transform_2, window_bounds = array<i64: 1, 32>}, {pipeline_mode = #tpu.pipeline_mode<synchronous>, transform_indices = @transform_3, window_bounds = array<i64: 1, 32>}, {pipeline_mode = #tpu.pipeline_mode<synchronous>, transform_indices = @transform_4, window_bounds = array<i64: 32, 96>}, {pipeline_mode = #tpu.pipeline_mode<synchronous>, transform_indices = @transform_5, window_bounds = array<i64: 1, 96>}, {pipeline_mode = #tpu.pipeline_mode<synchronous>, transform_indices = @transform_6, window_bounds = array<i64: 32, 32>}, {pipeline_mode = #tpu.pipeline_mode<synchronous>, transform_indices = @transform_7, window_bounds = array<i64: 1, 32>}, {pipeline_mode = #tpu.pipeline_mode<synchronous>, transform_indices = @transform_8, window_bounds = array<i64: 1, 32>}, {pipeline_mode = #tpu.pipeline_mode<synchronous>, transform_indices = @transform_9, window_bounds = array<i64: 1, 32>}, {pipeline_mode = #tpu.pipeline_mode<synchronous>, transform_indices = @transform_10, window_bounds = array<i64: 32, 64>}, {pipeline_mode = #tpu.pipeline_mode<synchronous>, transform_indices = @transform_11, window_bounds = array<i64: 1, 64>}, {pipeline_mode = #tpu.pipeline_mode<synchronous>, transform_indices = @transform_12, window_bounds = array<i64: 64, 32>}, {pipeline_mode = #tpu.pipeline_mode<synchronous>, transform_indices = @transform_13, window_bounds = array<i64: 1, 32>}, {pipeline_mode = #tpu.pipeline_mode<synchronous>, transform_indices = @transform_14, window_bounds = array<i64: 1, 32>}, {pipeline_mode = #tpu.pipeline_mode<synchronous>, transform_indices = @transform_15, window_bounds = array<i64: 1, 32>}, {transform_indices = @transform_16, window_bounds = array<i64: 1, 8, 32>}]} {
    %c0 = arith.constant 0 : index
    %c0_0 = arith.constant 0 : index
    %c0_1 = arith.constant 0 : index
    %0 = vector.load %arg1[%c0, %c0_0, %c0_1] : memref<1x8x32xf32, #tpu.memory_space<vmem>>, vector<1x8x32xf32>
    %1 = vector.shape_cast %0 : vector<1x8x32xf32> to vector<8x32xf32>
    %c0_2 = arith.constant 0 : index
    %c0_3 = arith.constant 0 : index
    %2 = vector.load %arg3[%c0_2, %c0_3] : memref<1x32xf32, #tpu.memory_space<vmem>>, vector<1x32xf32>
    %c0_4 = arith.constant 0 : index
    %c0_5 = arith.constant 0 : index
    %3 = vector.load %arg4[%c0_4, %c0_5] : memref<1x32xf32, #tpu.memory_space<vmem>>, vector<1x32xf32>
    %cst = arith.constant dense<0.000000e+00> : vector<8xf32>
    %4 = vector.multi_reduction <add>, %1, %cst [1] : vector<8x32xf32> to vector<8xf32>
    %5 = vector.shape_cast %4 : vector<8xf32> to vector<8x1xf32>
    %cst_6 = arith.constant 3.200000e+01 : f32
    %6 = vector.broadcast %cst_6 : f32 to vector<8x1xf32>
    %7 = arith.divf %5, %6 : vector<8x1xf32>
    %8 = vector.broadcast %7 : vector<8x1xf32> to vector<8x32xf32>
    %9 = arith.subf %1, %8 : vector<8x32xf32>
    %10 = arith.mulf %9, %9 : vector<8x32xf32>
    %cst_7 = arith.constant dense<0.000000e+00> : vector<8xf32>
    %11 = vector.multi_reduction <add>, %10, %cst_7 [1] : vector<8x32xf32> to vector<8xf32>
    %12 = vector.shape_cast %11 : vector<8xf32> to vector<8x1xf32>
    %cst_8 = arith.constant 3.200000e+01 : f32
    %13 = vector.broadcast %cst_8 : f32 to vector<8x1xf32>
    %14 = arith.divf %12, %13 : vector<8x1xf32>
    %15 = vector.broadcast %7 : vector<8x1xf32> to vector<8x32xf32>
    %16 = arith.subf %1, %15 : vector<8x32xf32>
    %cst_9 = arith.constant 9.99999996E-13 : f32
    %17 = vector.broadcast %cst_9 : f32 to vector<8x1xf32>
    %18 = arith.addf %14, %17 : vector<8x1xf32>
    %19 = math.rsqrt %18 : vector<8x1xf32>
    %20 = vector.broadcast %19 : vector<8x1xf32> to vector<8x32xf32>
    %21 = arith.mulf %16, %20 : vector<8x32xf32>
    %22 = vector.broadcast %2 : vector<1x32xf32> to vector<8x32xf32>
    %23 = arith.mulf %21, %22 : vector<8x32xf32>
    %24 = vector.broadcast %3 : vector<1x32xf32> to vector<8x32xf32>
    %25 = arith.addf %23, %24 : vector<8x32xf32>
    %c0_10 = arith.constant 0 : index
    %c0_11 = arith.constant 0 : index
    %26 = vector.load %arg5[%c0_10, %c0_11] : memref<32x96xf32, #tpu.memory_space<vmem>>, vector<32x96xf32>
    %cst_12 = arith.constant dense<0.000000e+00> : vector<8x96xf32>
    %27 = tpu.matmul %25, %26, %cst_12 {dimension_numbers = #tpu.dot_dimension_numbers<[1], [0], [0], [1], [0, 0, 1, 1], [], []>} : vector<8x32xf32>, vector<32x96xf32>, vector<8x96xf32> -> vector<8x96xf32>
    %c0_13 = arith.constant 0 : index
    %c0_14 = arith.constant 0 : index
    %28 = vector.load %arg6[%c0_13, %c0_14] : memref<1x96xf32, #tpu.memory_space<vmem>>, vector<1x96xf32>
    %29 = vector.broadcast %28 : vector<1x96xf32> to vector<8x96xf32>
    %30 = arith.addf %27, %29 : vector<8x96xf32>
    %c0_15 = arith.constant 0 : index
    %c0_16 = arith.constant 0 : index
    %c0_17 = arith.constant 0 : index
    %31 = vector.load %arg2[%c0_15, %c0_16, %c0_17] : memref<1x1x8xf32, #tpu.memory_space<vmem>>, vector<1x1x8xf32>
    %32 = vector.shape_cast %31 : vector<1x1x8xf32> to vector<1x8xf32>
    %33 = vector.extract_strided_slice %30 {offsets = [0, 0], sizes = [8, 16], strides = [1, 1]} : vector<8x96xf32> to vector<8x16xf32>
    %34 = vector.extract_strided_slice %30 {offsets = [0, 32], sizes = [8, 16], strides = [1, 1]} : vector<8x96xf32> to vector<8x16xf32>
    %35 = vector.extract_strided_slice %30 {offsets = [0, 64], sizes = [8, 16], strides = [1, 1]} : vector<8x96xf32> to vector<8x16xf32>
    %cst_18 = arith.constant dense<0.000000e+00> : vector<8x8xf32>
    %36 = tpu.matmul %33, %34, %cst_18 {dimension_numbers = #tpu.dot_dimension_numbers<[1], [1], [0], [0], [0, 0, 1, 0], [], []>} : vector<8x16xf32>, vector<8x16xf32>, vector<8x8xf32> -> vector<8x8xf32>
    %cst_19 = arith.constant 2.500000e-01 : f32
    %37 = vector.broadcast %cst_19 : f32 to vector<8x8xf32>
    %38 = arith.mulf %36, %37 : vector<8x8xf32>
    %39 = vector.broadcast %32 : vector<1x8xf32> to vector<8x8xf32>
    %40 = arith.addf %38, %39 : vector<8x8xf32>
    %cst_20 = arith.constant dense<0xFF800000> : vector<8xf32>
    %41 = vector.multi_reduction <maximumf>, %40, %cst_20 [1] : vector<8x8xf32> to vector<8xf32>
    %42 = vector.shape_cast %41 : vector<8xf32> to vector<8x1xf32>
    %43 = vector.broadcast %42 : vector<8x1xf32> to vector<8x8xf32>
    %44 = arith.subf %40, %43 : vector<8x8xf32>
    %45 = math.exp %44 : vector<8x8xf32>
    %cst_21 = arith.constant dense<0.000000e+00> : vector<8xf32>
    %46 = vector.multi_reduction <add>, %45, %cst_21 [1] : vector<8x8xf32> to vector<8xf32>
    %47 = vector.shape_cast %46 : vector<8xf32> to vector<8x1xf32>
    %48 = tpu.reciprocal %47 {approx = true} : vector<8x1xf32> -> vector<8x1xf32>
    %49 = vector.broadcast %48 : vector<8x1xf32> to vector<8x8xf32>
    %50 = arith.mulf %45, %49 : vector<8x8xf32>
    %cst_22 = arith.constant dense<0.000000e+00> : vector<8x16xf32>
    %51 = tpu.matmul %50, %35, %cst_22 {dimension_numbers = #tpu.dot_dimension_numbers<[1], [0], [0], [1], [0, 0, 1, 1], [], []>} : vector<8x8xf32>, vector<8x16xf32>, vector<8x16xf32> -> vector<8x16xf32>
    %52 = vector.extract_strided_slice %30 {offsets = [0, 16], sizes = [8, 16], strides = [1, 1]} : vector<8x96xf32> to vector<8x16xf32>
    %53 = vector.extract_strided_slice %30 {offsets = [0, 48], sizes = [8, 16], strides = [1, 1]} : vector<8x96xf32> to vector<8x16xf32>
    %54 = vector.extract_strided_slice %30 {offsets = [0, 80], sizes = [8, 16], strides = [1, 1]} : vector<8x96xf32> to vector<8x16xf32>
    %cst_23 = arith.constant dense<0.000000e+00> : vector<8x8xf32>
    %55 = tpu.matmul %52, %53, %cst_23 {dimension_numbers = #tpu.dot_dimension_numbers<[1], [1], [0], [0], [0, 0, 1, 0], [], []>} : vector<8x16xf32>, vector<8x16xf32>, vector<8x8xf32> -> vector<8x8xf32>
    %cst_24 = arith.constant 2.500000e-01 : f32
    %56 = vector.broadcast %cst_24 : f32 to vector<8x8xf32>
    %57 = arith.mulf %55, %56 : vector<8x8xf32>
    %58 = vector.broadcast %32 : vector<1x8xf32> to vector<8x8xf32>
    %59 = arith.addf %57, %58 : vector<8x8xf32>
    %cst_25 = arith.constant dense<0xFF800000> : vector<8xf32>
    %60 = vector.multi_reduction <maximumf>, %59, %cst_25 [1] : vector<8x8xf32> to vector<8xf32>
    %61 = vector.shape_cast %60 : vector<8xf32> to vector<8x1xf32>
    %62 = vector.broadcast %61 : vector<8x1xf32> to vector<8x8xf32>
    %63 = arith.subf %59, %62 : vector<8x8xf32>
    %64 = math.exp %63 : vector<8x8xf32>
    %cst_26 = arith.constant dense<0.000000e+00> : vector<8xf32>
    %65 = vector.multi_reduction <add>, %64, %cst_26 [1] : vector<8x8xf32> to vector<8xf32>
    %66 = vector.shape_cast %65 : vector<8xf32> to vector<8x1xf32>
    %67 = tpu.reciprocal %66 {approx = true} : vector<8x1xf32> -> vector<8x1xf32>
    %68 = vector.broadcast %67 : vector<8x1xf32> to vector<8x8xf32>
    %69 = arith.mulf %64, %68 : vector<8x8xf32>
    %cst_27 = arith.constant dense<0.000000e+00> : vector<8x16xf32>
    %70 = tpu.matmul %69, %54, %cst_27 {dimension_numbers = #tpu.dot_dimension_numbers<[1], [0], [0], [1], [0, 0, 1, 1], [], []>} : vector<8x8xf32>, vector<8x16xf32>, vector<8x16xf32> -> vector<8x16xf32>
    %71 = tpu.concatenate %51, %70 in 1 : vector<8x16xf32>, vector<8x16xf32> -> vector<8x32xf32>
    %c0_28 = arith.constant 0 : index
    %c0_29 = arith.constant 0 : index
    %72 = vector.load %arg7[%c0_28, %c0_29] : memref<32x32xf32, #tpu.memory_space<vmem>>, vector<32x32xf32>
    %cst_30 = arith.constant dense<0.000000e+00> : vector<8x32xf32>
    %73 = tpu.matmul %71, %72, %cst_30 {dimension_numbers = #tpu.dot_dimension_numbers<[1], [0], [0], [1], [0, 0, 1, 1], [], []>} : vector<8x32xf32>, vector<32x32xf32>, vector<8x32xf32> -> vector<8x32xf32>
    %c0_31 = arith.constant 0 : index
    %c0_32 = arith.constant 0 : index
    %74 = vector.load %arg8[%c0_31, %c0_32] : memref<1x32xf32, #tpu.memory_space<vmem>>, vector<1x32xf32>
    %75 = vector.broadcast %74 : vector<1x32xf32> to vector<8x32xf32>
    %76 = arith.addf %73, %75 : vector<8x32xf32>
    %77 = arith.addf %25, %76 : vector<8x32xf32>
    %c0_33 = arith.constant 0 : index
    %c0_34 = arith.constant 0 : index
    %78 = vector.load %arg9[%c0_33, %c0_34] : memref<1x32xf32, #tpu.memory_space<vmem>>, vector<1x32xf32>
    %c0_35 = arith.constant 0 : index
    %c0_36 = arith.constant 0 : index
    %79 = vector.load %arg10[%c0_35, %c0_36] : memref<1x32xf32, #tpu.memory_space<vmem>>, vector<1x32xf32>
    %cst_37 = arith.constant dense<0.000000e+00> : vector<8xf32>
    %80 = vector.multi_reduction <add>, %77, %cst_37 [1] : vector<8x32xf32> to vector<8xf32>
    %81 = vector.shape_cast %80 : vector<8xf32> to vector<8x1xf32>
    %cst_38 = arith.constant 3.200000e+01 : f32
    %82 = vector.broadcast %cst_38 : f32 to vector<8x1xf32>
    %83 = arith.divf %81, %82 : vector<8x1xf32>
    %84 = vector.broadcast %83 : vector<8x1xf32> to vector<8x32xf32>
    %85 = arith.subf %77, %84 : vector<8x32xf32>
    %86 = arith.mulf %85, %85 : vector<8x32xf32>
    %cst_39 = arith.constant dense<0.000000e+00> : vector<8xf32>
    %87 = vector.multi_reduction <add>, %86, %cst_39 [1] : vector<8x32xf32> to vector<8xf32>
    %88 = vector.shape_cast %87 : vector<8xf32> to vector<8x1xf32>
    %cst_40 = arith.constant 3.200000e+01 : f32
    %89 = vector.broadcast %cst_40 : f32 to vector<8x1xf32>
    %90 = arith.divf %88, %89 : vector<8x1xf32>
    %91 = vector.broadcast %83 : vector<8x1xf32> to vector<8x32xf32>
    %92 = arith.subf %77, %91 : vector<8x32xf32>
    %cst_41 = arith.constant 9.99999996E-13 : f32
    %93 = vector.broadcast %cst_41 : f32 to vector<8x1xf32>
    %94 = arith.addf %90, %93 : vector<8x1xf32>
    %95 = math.rsqrt %94 : vector<8x1xf32>
    %96 = vector.broadcast %95 : vector<8x1xf32> to vector<8x32xf32>
    %97 = arith.mulf %92, %96 : vector<8x32xf32>
    %98 = vector.broadcast %78 : vector<1x32xf32> to vector<8x32xf32>
    %99 = arith.mulf %97, %98 : vector<8x32xf32>
    %100 = vector.broadcast %79 : vector<1x32xf32> to vector<8x32xf32>
    %101 = arith.addf %99, %100 : vector<8x32xf32>
    %c0_42 = arith.constant 0 : index
    %c0_43 = arith.constant 0 : index
    %102 = vector.load %arg11[%c0_42, %c0_43] : memref<32x64xf32, #tpu.memory_space<vmem>>, vector<32x64xf32>
    %cst_44 = arith.constant dense<0.000000e+00> : vector<8x64xf32>
    %103 = tpu.matmul %101, %102, %cst_44 {dimension_numbers = #tpu.dot_dimension_numbers<[1], [0], [0], [1], [0, 0, 1, 1], [], []>} : vector<8x32xf32>, vector<32x64xf32>, vector<8x64xf32> -> vector<8x64xf32>
    %c0_45 = arith.constant 0 : index
    %c0_46 = arith.constant 0 : index
    %104 = vector.load %arg12[%c0_45, %c0_46] : memref<1x64xf32, #tpu.memory_space<vmem>>, vector<1x64xf32>
    %105 = vector.broadcast %104 : vector<1x64xf32> to vector<8x64xf32>
    %106 = arith.addf %103, %105 : vector<8x64xf32>
    %cst_47 = arith.constant 5.000000e-01 : f32
    %107 = vector.broadcast %cst_47 : f32 to vector<8x64xf32>
    %108 = arith.mulf %107, %106 : vector<8x64xf32>
    %cst_48 = arith.constant 0.707106769 : f32
    %109 = vector.broadcast %cst_48 : f32 to vector<8x64xf32>
    %110 = arith.mulf %106, %109 : vector<8x64xf32>
    %cst_49 = arith.constant 0.000000e+00 : f32
    %111 = vector.broadcast %cst_49 : f32 to vector<8x64xf32>
    %112 = arith.cmpf olt, %110, %111 : vector<8x64xf32>
    %cst_50 = arith.constant -1.000000e+00 : f32
    %cst_51 = arith.constant 1.000000e+00 : f32
    %113 = vector.broadcast %cst_50 : f32 to vector<8x64xf32>
    %114 = vector.broadcast %cst_51 : f32 to vector<8x64xf32>
    %115 = arith.select %112, %113, %114 : vector<8x64xi1>, vector<8x64xf32>
    %116 = math.absf %110 : vector<8x64xf32>
    %cst_52 = arith.constant 0.327591091 : f32
    %117 = vector.broadcast %cst_52 : f32 to vector<8x64xf32>
    %118 = arith.mulf %117, %116 : vector<8x64xf32>
    %cst_53 = arith.constant 1.000000e+00 : f32
    %119 = vector.broadcast %cst_53 : f32 to vector<8x64xf32>
    %120 = arith.addf %119, %118 : vector<8x64xf32>
    %cst_54 = arith.constant 1.000000e+00 : f32
    %121 = vector.broadcast %cst_54 : f32 to vector<8x64xf32>
    %122 = arith.divf %121, %120 : vector<8x64xf32>
    %cst_55 = arith.constant 1.06140542 : f32
    %123 = vector.broadcast %cst_55 : f32 to vector<8x64xf32>
    %124 = arith.mulf %123, %122 : vector<8x64xf32>
    %cst_56 = arith.constant -1.45315206 : f32
    %125 = vector.broadcast %cst_56 : f32 to vector<8x64xf32>
    %126 = arith.addf %124, %125 : vector<8x64xf32>
    %127 = arith.mulf %126, %122 : vector<8x64xf32>
    %cst_57 = arith.constant 1.42141378 : f32
    %128 = vector.broadcast %cst_57 : f32 to vector<8x64xf32>
    %129 = arith.addf %127, %128 : vector<8x64xf32>
    %130 = arith.mulf %129, %122 : vector<8x64xf32>
    %cst_58 = arith.constant -0.284496725 : f32
    %131 = vector.broadcast %cst_58 : f32 to vector<8x64xf32>
    %132 = arith.addf %130, %131 : vector<8x64xf32>
    %133 = arith.mulf %132, %122 : vector<8x64xf32>
    %cst_59 = arith.constant 0.254829586 : f32
    %134 = vector.broadcast %cst_59 : f32 to vector<8x64xf32>
    %135 = arith.addf %133, %134 : vector<8x64xf32>
    %136 = arith.mulf %135, %122 : vector<8x64xf32>
    %cst_60 = arith.constant 0.000000e+00 : f32
    %137 = vector.broadcast %cst_60 : f32 to vector<8x64xf32>
    %138 = arith.subf %137, %116 : vector<8x64xf32>
    %139 = arith.mulf %138, %116 : vector<8x64xf32>
    %140 = math.exp %139 : vector<8x64xf32>
    %141 = arith.mulf %136, %140 : vector<8x64xf32>
    %cst_61 = arith.constant 1.000000e+00 : f32
    %142 = vector.broadcast %cst_61 : f32 to vector<8x64xf32>
    %143 = arith.subf %142, %141 : vector<8x64xf32>
    %144 = arith.mulf %115, %143 : vector<8x64xf32>
    %cst_62 = arith.constant 1.000000e+00 : f32
    %145 = vector.broadcast %cst_62 : f32 to vector<8x64xf32>
    %146 = arith.addf %145, %144 : vector<8x64xf32>
    %147 = arith.mulf %108, %146 : vector<8x64xf32>
    %c0_63 = arith.constant 0 : index
    %c0_64 = arith.constant 0 : index
    %148 = vector.load %arg13[%c0_63, %c0_64] : memref<64x32xf32, #tpu.memory_space<vmem>>, vector<64x32xf32>
    %cst_65 = arith.constant dense<0.000000e+00> : vector<8x32xf32>
    %149 = tpu.matmul %147, %148, %cst_65 {dimension_numbers = #tpu.dot_dimension_numbers<[1], [0], [0], [1], [0, 0, 1, 1], [], []>} : vector<8x64xf32>, vector<64x32xf32>, vector<8x32xf32> -> vector<8x32xf32>
    %c0_66 = arith.constant 0 : index
    %c0_67 = arith.constant 0 : index
    %150 = vector.load %arg14[%c0_66, %c0_67] : memref<1x32xf32, #tpu.memory_space<vmem>>, vector<1x32xf32>
    %151 = vector.broadcast %150 : vector<1x32xf32> to vector<8x32xf32>
    %152 = arith.addf %149, %151 : vector<8x32xf32>
    %153 = arith.addf %101, %152 : vector<8x32xf32>
    %c0_68 = arith.constant 0 : index
    %c0_69 = arith.constant 0 : index
    %154 = vector.load %arg15[%c0_68, %c0_69] : memref<1x32xf32, #tpu.memory_space<vmem>>, vector<1x32xf32>
    %c0_70 = arith.constant 0 : index
    %c0_71 = arith.constant 0 : index
    %155 = vector.load %arg16[%c0_70, %c0_71] : memref<1x32xf32, #tpu.memory_space<vmem>>, vector<1x32xf32>
    %cst_72 = arith.constant dense<0.000000e+00> : vector<8xf32>
    %156 = vector.multi_reduction <add>, %153, %cst_72 [1] : vector<8x32xf32> to vector<8xf32>
    %157 = vector.shape_cast %156 : vector<8xf32> to vector<8x1xf32>
    %cst_73 = arith.constant 3.200000e+01 : f32
    %158 = vector.broadcast %cst_73 : f32 to vector<8x1xf32>
    %159 = arith.divf %157, %158 : vector<8x1xf32>
    %160 = vector.broadcast %159 : vector<8x1xf32> to vector<8x32xf32>
    %161 = arith.subf %153, %160 : vector<8x32xf32>
    %162 = arith.mulf %161, %161 : vector<8x32xf32>
    %cst_74 = arith.constant dense<0.000000e+00> : vector<8xf32>
    %163 = vector.multi_reduction <add>, %162, %cst_74 [1] : vector<8x32xf32> to vector<8xf32>
    %164 = vector.shape_cast %163 : vector<8xf32> to vector<8x1xf32>
    %cst_75 = arith.constant 3.200000e+01 : f32
    %165 = vector.broadcast %cst_75 : f32 to vector<8x1xf32>
    %166 = arith.divf %164, %165 : vector<8x1xf32>
    %167 = vector.broadcast %159 : vector<8x1xf32> to vector<8x32xf32>
    %168 = arith.subf %153, %167 : vector<8x32xf32>
    %cst_76 = arith.constant 9.99999996E-13 : f32
    %169 = vector.broadcast %cst_76 : f32 to vector<8x1xf32>
    %170 = arith.addf %166, %169 : vector<8x1xf32>
    %171 = math.rsqrt %170 : vector<8x1xf32>
    %172 = vector.broadcast %171 : vector<8x1xf32> to vector<8x32xf32>
    %173 = arith.mulf %168, %172 : vector<8x32xf32>
    %174 = vector.broadcast %154 : vector<1x32xf32> to vector<8x32xf32>
    %175 = arith.mulf %173, %174 : vector<8x32xf32>
    %176 = vector.broadcast %155 : vector<1x32xf32> to vector<8x32xf32>
    %177 = arith.addf %175, %176 : vector<8x32xf32>
    %c0_77 = arith.constant 0 : index
    %c0_78 = arith.constant 0 : index
    %c0_79 = arith.constant 0 : index
    %178 = vector.load %arg17[%c0_77, %c0_78, %c0_79] : memref<1x8x32xf32, #tpu.memory_space<vmem>>, vector<1x8x32xf32>
    %179 = vector.shape_cast %178 : vector<1x8x32xf32> to vector<8x32xf32>
    %180 = vector.shape_cast %177 : vector<8x32xf32> to vector<1x8x32xf32>
    tpu.vector_store %arg17[%c0_77, %c0_78, %c0_79], %180 {strides = array<i32>} : memref<1x8x32xf32, #tpu.memory_space<vmem>>, vector<1x8x32xf32>,
    return
  }
  func.func @transform_0(%arg0: i32) -> (i32, i32, i32) {
    %c0_i32 = arith.constant 0 : i32
    %c0_i32_0 = arith.constant 0 : i32
    %c0_i32_1 = arith.constant 0 : i32
    return %arg0, %c0_i32, %c0_i32_0 : i32, i32, i32
  }
  func.func @transform_1(%arg0: i32) -> (i32, i32, i32) {
    %c0_i32 = arith.constant 0 : i32
    %c0_i32_0 = arith.constant 0 : i32
    %c0_i32_1 = arith.constant 0 : i32
    return %arg0, %c0_i32, %c0_i32_0 : i32, i32, i32
  }
  func.func @transform_2(%arg0: i32) -> (i32, i32) {
    %c0_i32 = arith.constant 0 : i32
    %c0_i32_0 = arith.constant 0 : i32
    %c0_i32_1 = arith.constant 0 : i32
    return %c0_i32, %c0_i32_0 : i32, i32
  }
  func.func @transform_3(%arg0: i32) -> (i32, i32) {
    %c0_i32 = arith.constant 0 : i32
    %c0_i32_0 = arith.constant 0 : i32
    %c0_i32_1 = arith.constant 0 : i32
    return %c0_i32, %c0_i32_0 : i32, i32
  }
  func.func @transform_4(%arg0: i32) -> (i32, i32) {
    %c0_i32 = arith.constant 0 : i32
    %c0_i32_0 = arith.constant 0 : i32
    %c0_i32_1 = arith.constant 0 : i32
    return %c0_i32, %c0_i32_0 : i32, i32
  }
  func.func @transform_5(%arg0: i32) -> (i32, i32) {
    %c0_i32 = arith.constant 0 : i32
    %c0_i32_0 = arith.constant 0 : i32
    %c0_i32_1 = arith.constant 0 : i32
    return %c0_i32, %c0_i32_0 : i32, i32
  }
  func.func @transform_6(%arg0: i32) -> (i32, i32) {
    %c0_i32 = arith.constant 0 : i32
    %c0_i32_0 = arith.constant 0 : i32
    %c0_i32_1 = arith.constant 0 : i32
    return %c0_i32, %c0_i32_0 : i32, i32
  }
  func.func @transform_7(%arg0: i32) -> (i32, i32) {
    %c0_i32 = arith.constant 0 : i32
    %c0_i32_0 = arith.constant 0 : i32
    %c0_i32_1 = arith.constant 0 : i32
    return %c0_i32, %c0_i32_0 : i32, i32
  }
  func.func @transform_8(%arg0: i32) -> (i32, i32) {
    %c0_i32 = arith.constant 0 : i32
    %c0_i32_0 = arith.constant 0 : i32
    %c0_i32_1 = arith.constant 0 : i32
    return %c0_i32, %c0_i32_0 : i32, i32
  }
  func.func @transform_9(%arg0: i32) -> (i32, i32) {
    %c0_i32 = arith.constant 0 : i32
    %c0_i32_0 = arith.constant 0 : i32
    %c0_i32_1 = arith.constant 0 : i32
    return %c0_i32, %c0_i32_0 : i32, i32
  }
  func.func @transform_10(%arg0: i32) -> (i32, i32) {
    %c0_i32 = arith.constant 0 : i32
    %c0_i32_0 = arith.constant 0 : i32
    %c0_i32_1 = arith.constant 0 : i32
    return %c0_i32, %c0_i32_0 : i32, i32
  }
  func.func @transform_11(%arg0: i32) -> (i32, i32) {
    %c0_i32 = arith.constant 0 : i32
    %c0_i32_0 = arith.constant 0 : i32
    %c0_i32_1 = arith.constant 0 : i32
    return %c0_i32, %c0_i32_0 : i32, i32
  }
  func.func @transform_12(%arg0: i32) -> (i32, i32) {
    %c0_i32 = arith.constant 0 : i32
    %c0_i32_0 = arith.constant 0 : i32
    %c0_i32_1 = arith.constant 0 : i32
    return %c0_i32, %c0_i32_0 : i32, i32
  }
  func.func @transform_13(%arg0: i32) -> (i32, i32) {
    %c0_i32 = arith.constant 0 : i32
    %c0_i32_0 = arith.constant 0 : i32
    %c0_i32_1 = arith.constant 0 : i32
    return %c0_i32, %c0_i32_0 : i32, i32
  }
  func.func @transform_14(%arg0: i32) -> (i32, i32) {
    %c0_i32 = arith.constant 0 : i32
    %c0_i32_0 = arith.constant 0 : i32
    %c0_i32_1 = arith.constant 0 : i32
    return %c0_i32, %c0_i32_0 : i32, i32
  }
  func.func @transform_15(%arg0: i32) -> (i32, i32) {
    %c0_i32 = arith.constant 0 : i32
    %c0_i32_0 = arith.constant 0 : i32
    %c0_i32_1 = arith.constant 0 : i32
    return %c0_i32, %c0_i32_0 : i32, i32
  }
  func.func @transform_16(%arg0: i32) -> (i32, i32, i32) {
    %c0_i32 = arith.constant 0 : i32
    %c0_i32_0 = arith.constant 0 : i32
    %c0_i32_1 = arith.constant 0 : i32
    return %arg0, %c0_i32, %c0_i32_0 : i32, i32, i32
  }
}

</mosaic_0001>

<llo_original>
// kernel: forward.1
$region0: #{forward.1}
  #allocation0 [shape = 'u32[]', space=smem, size = 0x4, offset = 0x4, fixed_abs, tag = 'smem constant byte address 0x4 - core index']
  #allocation1 [shape = 'u32[72,128]{1,0:T(1,128)}', space=vmem, size = 0x9000, scoped, tag = 'internal scratch']
  %s0 = inlined_call_operand.vmem [shape: f32[2,8,32], index: 0, kind: input, shape index: {}]
  %s1 = inlined_call_operand.vmem [shape: f32[2,1,8], index: 1, kind: input, shape index: {}]
  %s2 = inlined_call_operand.vmem [shape: f32[1,32], index: 2, kind: input, shape index: {}]
  %s3 = inlined_call_operand.vmem [shape: f32[1,32], index: 3, kind: input, shape index: {}]
  %s4 = inlined_call_operand.vmem [shape: f32[32,96], index: 4, kind: input, shape index: {}]
  %s5 = inlined_call_operand.vmem [shape: f32[1,96], index: 5, kind: input, shape index: {}]
  %s6 = inlined_call_operand.vmem [shape: f32[32,32], index: 6, kind: input, shape index: {}]
  %s7 = inlined_call_operand.vmem [shape: f32[1,32], index: 7, kind: input, shape index: {}]
  %s8 = inlined_call_operand.vmem [shape: f32[1,32], index: 8, kind: input, shape index: {}]
  %s9 = inlined_call_operand.vmem [shape: f32[1,32], index: 9, kind: input, shape index: {}]
  %s10 = inlined_call_operand.vmem [shape: f32[32,64], index: 10, kind: input, shape index: {}]
  %s11 = inlined_call_operand.vmem [shape: f32[1,64], index: 11, kind: input, shape index: {}]
  %s12 = inlined_call_operand.vmem [shape: f32[64,32], index: 12, kind: input, shape index: {}]
  %s13 = inlined_call_operand.vmem [shape: f32[1,32], index: 13, kind: input, shape index: {}]
  %s14 = inlined_call_operand.vmem [shape: f32[1,32], index: 14, kind: input, shape index: {}]
  %s15 = inlined_call_operand.vmem [shape: f32[1,32], index: 15, kind: input, shape index: {}]
  %s16 = inlined_call_operand.hbm [shape: f32[2,8,32], index: 16, kind: output, shape index: {}]
  %s17 = sld [smem:[#allocation0]]
  $region97: #{forward.1} parent=0
    _
  %s19 = ssub.s32 1, %s17
  %s20 = scalar_select 0, %s19, %s17
  $region1: #{forward.1} parent=0
    #allocation2 [shape = 'u8[8192]{0}', space=vmem, size = 0x2000, scoped, tag = 'output window, operand 0']
    #allocation3 [shape = 's32[2]{0}', space=sflag, size = 0x8, scoped, tag = 'scoped memory for forward.1']
    %21 = vsyncpa [#allocation3], 0
    %s22 = scalar_lea.sflag [#allocation3], 1
    %23 = vsyncpa %s22, 0
    loop: start=0, step=1, limit=4
    $region2: #{forward.1} parent=1 // loop_pre_header
      _
    $region3: #{forward.1} parent=1 // loop_header
      %s25 = sphi 0, %s29
      %p26 = scmp.ge.s32.totalorder %s25, 4
      %s35 = sphi 0, %s37
      %s38 = sphi 0, %s35
      %s39 = sphi 0, %s38
      %s55 = sphi 0, %s39
      %s61 = sphi 0, %s63
      %s64 = sphi 0, %s61
      %s65 = sphi 0, %s64
      %s81 = sphi 0, %s65
      %s85 = sphi 0, %s85
      %s87 = sphi 0, %s85
      %s88 = sphi 0, %s87
      %s102 = sphi 0, %s88
      %s106 = sphi 0, %s106
      %s108 = sphi 0, %s106
      %s109 = sphi 0, %s108
      %s123 = sphi 0, %s109
      %s127 = sphi 0, %s127
      %s129 = sphi 0, %s127
      %s130 = sphi 0, %s129
      %s144 = sphi 0, %s130
      %s148 = sphi 0, %s148
      %s150 = sphi 0, %s148
      %s151 = sphi 0, %s150
      %s165 = sphi 0, %s151
      %s169 = sphi 0, %s169
      %s171 = sphi 0, %s169
      %s172 = sphi 0, %s171
      %s186 = sphi 0, %s172
      %s190 = sphi 0, %s190
      %s192 = sphi 0, %s190
      %s193 = sphi 0, %s192
      %s207 = sphi 0, %s193
      %s211 = sphi 0, %s211
      %s213 = sphi 0, %s211
      %s214 = sphi 0, %s213
      %s228 = sphi 0, %s214
      %s232 = sphi 0, %s232
      %s234 = sphi 0, %s232
      %s235 = sphi 0, %s234
      %s249 = sphi 0, %s235
      %s253 = sphi 0, %s253
      %s255 = sphi 0, %s253
      %s256 = sphi 0, %s255
      %s270 = sphi 0, %s256
      %s274 = sphi 0, %s274
      %s276 = sphi 0, %s274
      %s277 = sphi 0, %s276
      %s291 = sphi 0, %s277
      %s295 = sphi 0, %s295
      %s297 = sphi 0, %s295
      %s298 = sphi 0, %s297
      %s312 = sphi 0, %s298
      %s316 = sphi 0, %s316
      %s318 = sphi 0, %s316
      %s319 = sphi 0, %s318
      %s333 = sphi 0, %s319
      %s337 = sphi 0, %s337
      %s339 = sphi 0, %s337
      %s340 = sphi 0, %s339
      %s354 = sphi 0, %s340
      %s358 = sphi 0, %s358
      %s360 = sphi 0, %s358
      %s361 = sphi 0, %s360
      %s375 = sphi 0, %s361
      %s381 = sphi 0, %s383
      %s384 = sphi 0, %s381
      %s385 = sphi 0, %s384
      %s401 = sphi 0, %s385
    $region4: #{forward.1} parent=1 // loop_header_branch
      %28 = sbr.rel (%p26) target = $region8
    $region5: #{forward.1} parent=1 // loop_body
      %s30 = ssub.s32 %s25, 1
      %s31 = ssub.s32 %s25, 2
      %s32 = sadd.s32 %s25, 1
      %s33 = ssub.s32 %s25, %s32
      %p34 = scmp.eq.s32.totalorder %s33, 0
      %s36 = sadd.s32 %s35, 1
      %s37 = scalar_select %p34, %s35, %s36
      %p40 = pneg %p34
      %p41 = scmp.eq.s32.totalorder %s25, 1
      %p42 = por %p40, %p41
      %p43 = scmp.ne.s32.totalorder %s35, %s38
      %p44 = scmp.eq.s32.totalorder %s25, 0
      %p45 = por %p43, %p44
      %p46 = scmp.ne.s32.totalorder %s35, %s38
      %p47 = scmp.eq.s32.totalorder %s30, 1
      %p48 = por %p46, %p47
      %p49 = scmp.ne.s32.totalorder %s38, %s39
      %p50 = scmp.eq.s32.totalorder %s30, 0
      %p51 = por %p49, %p50
      %p52 = scmp.ne.s32.totalorder %s38, %s39
      %p53 = scmp.eq.s32.totalorder %s31, 1
      %p54 = por %p52, %p53
      %p56 = scmp.ne.s32.totalorder %s39, %s55
      %p57 = scmp.eq.s32.totalorder %s31, 0
      %p58 = por %p56, %p57
      %s59 = ssub.s32 %s25, %s32
      %p60 = scmp.eq.s32.totalorder %s59, 0
      %s62 = sadd.s32 %s61, 1
      %s63 = scalar_select %p60, %s61, %s62
      %p66 = pneg %p60
      %p67 = scmp.eq.s32.totalorder %s25, 1
      %p68 = por %p66, %p67
      %p69 = scmp.ne.s32.totalorder %s61, %s64
      %p70 = scmp.eq.s32.totalorder %s25, 0
      %p71 = por %p69, %p70
      %p72 = scmp.ne.s32.totalorder %s61, %s64
      %p73 = scmp.eq.s32.totalorder %s30, 1
      %p74 = por %p72, %p73
      %p75 = scmp.ne.s32.totalorder %s64, %s65
      %p76 = scmp.eq.s32.totalorder %s30, 0
      %p77 = por %p75, %p76
      %p78 = scmp.ne.s32.totalorder %s64, %s65
      %p79 = scmp.eq.s32.totalorder %s31, 1
      %p80 = por %p78, %p79
      %p82 = scmp.ne.s32.totalorder %s65, %s81
      %p83 = scmp.eq.s32.totalorder %s31, 0
      %p84 = por %p82, %p83
      %s86 = sadd.s32 %s85, 1
      %p89 = scmp.eq.s32.totalorder %s25, 1
      %p90 = scmp.ne.s32.totalorder %s85, %s87
      %p91 = scmp.eq.s32.totalorder %s25, 0
      %p92 = por %p90, %p91
      %p93 = scmp.ne.s32.totalorder %s85, %s87
      %p94 = scmp.eq.s32.totalorder %s30, 1
      %p95 = por %p93, %p94
      %p96 = scmp.ne.s32.totalorder %s87, %s88
      %p97 = scmp.eq.s32.totalorder %s30, 0
      %p98 = por %p96, %p97
      %p99 = scmp.ne.s32.totalorder %s87, %s88
      %p100 = scmp.eq.s32.totalorder %s31, 1
      %p101 = por %p99, %p100
      %p103 = scmp.ne.s32.totalorder %s88, %s102
      %p104 = scmp.eq.s32.totalorder %s31, 0
      %p105 = por %p103, %p104
      %s107 = sadd.s32 %s106, 1
      %p110 = scmp.eq.s32.totalorder %s25, 1
      %p111 = scmp.ne.s32.totalorder %s106, %s108
      %p112 = scmp.eq.s32.totalorder %s25, 0
      %p113 = por %p111, %p112
      %p114 = scmp.ne.s32.totalorder %s106, %s108
      %p115 = scmp.eq.s32.totalorder %s30, 1
      %p116 = por %p114, %p115
      %p117 = scmp.ne.s32.totalorder %s108, %s109
      %p118 = scmp.eq.s32.totalorder %s30, 0
      %p119 = por %p117, %p118
      %p120 = scmp.ne.s32.totalorder %s108, %s109
      %p121 = scmp.eq.s32.totalorder %s31, 1
      %p122 = por %p120, %p121
      %p124 = scmp.ne.s32.totalorder %s109, %s123
      %p125 = scmp.eq.s32.totalorder %s31, 0
      %p126 = por %p124, %p125
      %s128 = sadd.s32 %s127, 1
      %p131 = scmp.eq.s32.totalorder %s25, 1
      %p132 = scmp.ne.s32.totalorder %s127, %s129
      %p133 = scmp.eq.s32.totalorder %s25, 0
      %p134 = por %p132, %p133
      %p135 = scmp.ne.s32.totalorder %s127, %s129
      %p136 = scmp.eq.s32.totalorder %s30, 1
      %p137 = por %p135, %p136
      %p138 = scmp.ne.s32.totalorder %s129, %s130
      %p139 = scmp.eq.s32.totalorder %s30, 0
      %p140 = por %p138, %p139
      %p141 = scmp.ne.s32.totalorder %s129, %s130
      %p142 = scmp.eq.s32.totalorder %s31, 1
      %p143 = por %p141, %p142
      %p145 = scmp.ne.s32.totalorder %s130, %s144
      %p146 = scmp.eq.s32.totalorder %s31, 0
      %p147 = por %p145, %p146
      %s149 = sadd.s32 %s148, 1
      %p152 = scmp.eq.s32.totalorder %s25, 1
      %p153 = scmp.ne.s32.totalorder %s148, %s150
      %p154 = scmp.eq.s32.totalorder %s25, 0
      %p155 = por %p153, %p154
      %p156 = scmp.ne.s32.totalorder %s148, %s150
      %p157 = scmp.eq.s32.totalorder %s30, 1
      %p158 = por %p156, %p157
      %p159 = scmp.ne.s32.totalorder %s150, %s151
      %p160 = scmp.eq.s32.totalorder %s30, 0
      %p161 = por %p159, %p160
      %p162 = scmp.ne.s32.totalorder %s150, %s151
      %p163 = scmp.eq.s32.totalorder %s31, 1
      %p164 = por %p162, %p163
      %p166 = scmp.ne.s32.totalorder %s151, %s165
      %p167 = scmp.eq.s32.totalorder %s31, 0
      %p168 = por %p166, %p167
      %s170 = sadd.s32 %s169, 1
      %p173 = scmp.eq.s32.totalorder %s25, 1
      %p174 = scmp.ne.s32.totalorder %s169, %s171
      %p175 = scmp.eq.s32.totalorder %s25, 0
      %p176 = por %p174, %p175
      %p177 = scmp.ne.s32.totalorder %s169, %s171
      %p178 = scmp.eq.s32.totalorder %s30, 1
      %p179 = por %p177, %p178
      %p180 = scmp.ne.s32.totalorder %s171, %s172
      %p181 = scmp.eq.s32.totalorder %s30, 0
      %p182 = por %p180, %p181
      %p183 = scmp.ne.s32.totalorder %s171, %s172
      %p184 = scmp.eq.s32.totalorder %s31, 1
      %p185 = por %p183, %p184
      %p187 = scmp.ne.s32.totalorder %s172, %s186
      %p188 = scmp.eq.s32.totalorder %s31, 0
      %p189 = por %p187, %p188
      %s191 = sadd.s32 %s190, 1
      %p194 = scmp.eq.s32.totalorder %s25, 1
      %p195 = scmp.ne.s32.totalorder %s190, %s192
      %p196 = scmp.eq.s32.totalorder %s25, 0
      %p197 = por %p195, %p196
      %p198 = scmp.ne.s32.totalorder %s190, %s192
      %p199 = scmp.eq.s32.totalorder %s30, 1
      %p200 = por %p198, %p199
      %p201 = scmp.ne.s32.totalorder %s192, %s193
      %p202 = scmp.eq.s32.totalorder %s30, 0
      %p203 = por %p201, %p202
      %p204 = scmp.ne.s32.totalorder %s192, %s193
      %p205 = scmp.eq.s32.totalorder %s31, 1
      %p206 = por %p204, %p205
      %p208 = scmp.ne.s32.totalorder %s193, %s207
      %p209 = scmp.eq.s32.totalorder %s31, 0
      %p210 = por %p208, %p209
      %s212 = sadd.s32 %s211, 1
      %p215 = scmp.eq.s32.totalorder %s25, 1
      %p216 = scmp.ne.s32.totalorder %s211, %s213
      %p217 = scmp.eq.s32.totalorder %s25, 0
      %p218 = por %p216, %p217
      %p219 = scmp.ne.s32.totalorder %s211, %s213
      %p220 = scmp.eq.s32.totalorder %s30, 1
      %p221 = por %p219, %p220
      %p222 = scmp.ne.s32.totalorder %s213, %s214
      %p223 = scmp.eq.s32.totalorder %s30, 0
      %p224 = por %p222, %p223
      %p225 = scmp.ne.s32.totalorder %s213, %s214
      %p226 = scmp.eq.s32.totalorder %s31, 1
      %p227 = por %p225, %p226
      %p229 = scmp.ne.s32.totalorder %s214, %s228
      %p230 = scmp.eq.s32.totalorder %s31, 0
      %p231 = por %p229, %p230
      %s233 = sadd.s32 %s232, 1
      %p236 = scmp.eq.s32.totalorder %s25, 1
      %p237 = scmp.ne.s32.totalorder %s232, %s234
      %p238 = scmp.eq.s32.totalorder %s25, 0
      %p239 = por %p237, %p238
      %p240 = scmp.ne.s32.totalorder %s232, %s234
      %p241 = scmp.eq.s32.totalorder %s30, 1
      %p242 = por %p240, %p241
      %p243 = scmp.ne.s32.totalorder %s234, %s235
      %p244 = scmp.eq.s32.totalorder %s30, 0
      %p245 = por %p243, %p244
      %p246 = scmp.ne.s32.totalorder %s234, %s235
      %p247 = scmp.eq.s32.totalorder %s31, 1
      %p248 = por %p246, %p247
      %p250 = scmp.ne.s32.totalorder %s235, %s249
      %p251 = scmp.eq.s32.totalorder %s31, 0
      %p252 = por %p250, %p251
      %s254 = sadd.s32 %s253, 1
      %p257 = scmp.eq.s32.totalorder %s25, 1
      %p258 = scmp.ne.s32.totalorder %s253, %s255
      %p259 = scmp.eq.s32.totalorder %s25, 0
      %p260 = por %p258, %p259
      %p261 = scmp.ne.s32.totalorder %s253, %s255
      %p262 = scmp.eq.s32.totalorder %s30, 1
      %p263 = por %p261, %p262
      %p264 = scmp.ne.s32.totalorder %s255, %s256
      %p265 = scmp.eq.s32.totalorder %s30, 0
      %p266 = por %p264, %p265
      %p267 = scmp.ne.s32.totalorder %s255, %s256
      %p268 = scmp.eq.s32.totalorder %s31, 1
      %p269 = por %p267, %p268
      %p271 = scmp.ne.s32.totalorder %s256, %s270
      %p272 = scmp.eq.s32.totalorder %s31, 0
      %p273 = por %p271, %p272
      %s275 = sadd.s32 %s274, 1
      %p278 = scmp.eq.s32.totalorder %s25, 1
      %p279 = scmp.ne.s32.totalorder %s274, %s276
      %p280 = scmp.eq.s32.totalorder %s25, 0
      %p281 = por %p279, %p280
      %p282 = scmp.ne.s32.totalorder %s274, %s276
      %p283 = scmp.eq.s32.totalorder %s30, 1
      %p284 = por %p282, %p283
      %p285 = scmp.ne.s32.totalorder %s276, %s277
      %p286 = scmp.eq.s32.totalorder %s30, 0
      %p287 = por %p285, %p286
      %p288 = scmp.ne.s32.totalorder %s276, %s277
      %p289 = scmp.eq.s32.totalorder %s31, 1
      %p290 = por %p288, %p289
      %p292 = scmp.ne.s32.totalorder %s277, %s291
      %p293 = scmp.eq.s32.totalorder %s31, 0
      %p294 = por %p292, %p293
      %s296 = sadd.s32 %s295, 1
      %p299 = scmp.eq.s32.totalorder %s25, 1
      %p300 = scmp.ne.s32.totalorder %s295, %s297
      %p301 = scmp.eq.s32.totalorder %s25, 0
      %p302 = por %p300, %p301
      %p303 = scmp.ne.s32.totalorder %s295, %s297
      %p304 = scmp.eq.s32.totalorder %s30, 1
      %p305 = por %p303, %p304
      %p306 = scmp.ne.s32.totalorder %s297, %s298
      %p307 = scmp.eq.s32.totalorder %s30, 0
      %p308 = por %p306, %p307
      %p309 = scmp.ne.s32.totalorder %s297, %s298
      %p310 = scmp.eq.s32.totalorder %s31, 1
      %p311 = por %p309, %p310
      %p313 = scmp.ne.s32.totalorder %s298, %s312
      %p314 = scmp.eq.s32.totalorder %s31, 0
      %p315 = por %p313, %p314
      %s317 = sadd.s32 %s316, 1
      %p320 = scmp.eq.s32.totalorder %s25, 1
      %p321 = scmp.ne.s32.totalorder %s316, %s318
      %p322 = scmp.eq.s32.totalorder %s25, 0
      %p323 = por %p321, %p322
      %p324 = scmp.ne.s32.totalorder %s316, %s318
      %p325 = scmp.eq.s32.totalorder %s30, 1
      %p326 = por %p324, %p325
      %p327 = scmp.ne.s32.totalorder %s318, %s319
      %p328 = scmp.eq.s32.totalorder %s30, 0
      %p329 = por %p327, %p328
      %p330 = scmp.ne.s32.totalorder %s318, %s319
      %p331 = scmp.eq.s32.totalorder %s31, 1
      %p332 = por %p330, %p331
      %p334 = scmp.ne.s32.totalorder %s319, %s333
      %p335 = scmp.eq.s32.totalorder %s31, 0
      %p336 = por %p334, %p335
      %s338 = sadd.s32 %s337, 1
      %p341 = scmp.eq.s32.totalorder %s25, 1
      %p342 = scmp.ne.s32.totalorder %s337, %s339
      %p343 = scmp.eq.s32.totalorder %s25, 0
      %p344 = por %p342, %p343
      %p345 = scmp.ne.s32.totalorder %s337, %s339
      %p346 = scmp.eq.s32.totalorder %s30, 1
      %p347 = por %p345, %p346
      %p348 = scmp.ne.s32.totalorder %s339, %s340
      %p349 = scmp.eq.s32.totalorder %s30, 0
      %p350 = por %p348, %p349
      %p351 = scmp.ne.s32.totalorder %s339, %s340
      %p352 = scmp.eq.s32.totalorder %s31, 1
      %p353 = por %p351, %p352
      %p355 = scmp.ne.s32.totalorder %s340, %s354
      %p356 = scmp.eq.s32.totalorder %s31, 0
      %p357 = por %p355, %p356
      %s359 = sadd.s32 %s358, 1
      %p362 = scmp.eq.s32.totalorder %s25, 1
      %p363 = scmp.ne.s32.totalorder %s358, %s360
      %p364 = scmp.eq.s32.totalorder %s25, 0
      %p365 = por %p363, %p364
      %p366 = scmp.ne.s32.totalorder %s358, %s360
      %p367 = scmp.eq.s32.totalorder %s30, 1
      %p368 = por %p366, %p367
      %p369 = scmp.ne.s32.totalorder %s360, %s361
      %p370 = scmp.eq.s32.totalorder %s30, 0
      %p371 = por %p369, %p370
      %p372 = scmp.ne.s32.totalorder %s360, %s361
      %p373 = scmp.eq.s32.totalorder %s31, 1
      %p374 = por %p372, %p373
      %p376 = scmp.ne.s32.totalorder %s361, %s375
      %p377 = scmp.eq.s32.totalorder %s31, 0
      %p378 = por %p376, %p377
      %s379 = ssub.s32 %s25, %s32
      %p380 = scmp.eq.s32.totalorder %s379, 0
      %s382 = sadd.s32 %s381, 1
      %s383 = scalar_select %p380, %s381, %s382
      %p386 = pneg %p380
      %p387 = scmp.eq.s32.totalorder %s25, 1
      %p388 = por %p386, %p387
      %p389 = scmp.ne.s32.totalorder %s381, %s384
      %p390 = scmp.eq.s32.totalorder %s25, 0
      %p391 = por %p389, %p390
      %p392 = scmp.ne.s32.totalorder %s381, %s384
      %p393 = scmp.eq.s32.totalorder %s30, 1
      %p394 = por %p392, %p393
      %p395 = scmp.ne.s32.totalorder %s384, %s385
      %p396 = scmp.eq.s32.totalorder %s30, 0
      %p397 = por %p395, %p396
      %p398 = scmp.ne.s32.totalorder %s384, %s385
      %p399 = scmp.eq.s32.totalorder %s31, 1
      %p400 = por %p398, %p399
      %p402 = scmp.ne.s32.totalorder %s385, %s401
      %p403 = scmp.eq.s32.totalorder %s31, 0
      %p404 = por %p402, %p403
      %p405 = scmp.le.s32.totalorder 1, %s25
      %p406 = scmp.lt.s32.totalorder %s25, 3
      %p407 = pnand %p405, %p406
      %p408 = pneg %p407
      // Predicated region
      $region9: #{forward.1} parent=5 // pred_check
        _
      $region10: #{forward.1} parent=5 // pred_check_branch
        %410 = sbr.rel (%p407) target = $region12
      $region11: #{forward.1} parent=5 // pred_region
        %s411 = ssub.s32 %s25, 1
        // Predicated region
        $region13: #{forward.1} parent=11 // pred_check
          %p412 = pneg %p98
        $region14: #{forward.1} parent=11 // pred_check_branch
          %414 = sbr.rel (%p412) target = $region16
        $region15: #{forward.1} parent=11 // pred_region
          _
        $region16: #{forward.1} parent=11 // pred_fallthru
          _
        // Predicated region
        $region17: #{forward.1} parent=11 // pred_check
          %p415 = pneg %p119
        $region18: #{forward.1} parent=11 // pred_check_branch
          %417 = sbr.rel (%p415) target = $region20
        $region19: #{forward.1} parent=11 // pred_region
          _
        $region20: #{forward.1} parent=11 // pred_fallthru
          _
        // Predicated region
        $region21: #{forward.1} parent=11 // pred_check
          %p418 = pneg %p140
        $region22: #{forward.1} parent=11 // pred_check_branch
          %420 = sbr.rel (%p418) target = $region24
        $region23: #{forward.1} parent=11 // pred_region
          _
        $region24: #{forward.1} parent=11 // pred_fallthru
          _
        // Predicated region
        $region25: #{forward.1} parent=11 // pred_check
          %p421 = pneg %p161
        $region26: #{forward.1} parent=11 // pred_check_branch
          %423 = sbr.rel (%p421) target = $region28
        $region27: #{forward.1} parent=11 // pred_region
          _
        $region28: #{forward.1} parent=11 // pred_fallthru
          _
        // Predicated region
        $region29: #{forward.1} parent=11 // pred_check
          %p424 = pneg %p182
        $region30: #{forward.1} parent=11 // pred_check_branch
          %426 = sbr.rel (%p424) target = $region32
        $region31: #{forward.1} parent=11 // pred_region
          _
        $region32: #{forward.1} parent=11 // pred_fallthru
          _
        // Predicated region
        $region33: #{forward.1} parent=11 // pred_check
          %p427 = pneg %p203
        $region34: #{forward.1} parent=11 // pred_check_branch
          %429 = sbr.rel (%p427) target = $region36
        $region35: #{forward.1} parent=11 // pred_region
          _
        $region36: #{forward.1} parent=11 // pred_fallthru
          _
        // Predicated region
        $region37: #{forward.1} parent=11 // pred_check
          %p430 = pneg %p224
        $region38: #{forward.1} parent=11 // pred_check_branch
          %432 = sbr.rel (%p430) target = $region40
        $region39: #{forward.1} parent=11 // pred_region
          _
        $region40: #{forward.1} parent=11 // pred_fallthru
          _
        // Predicated region
        $region41: #{forward.1} parent=11 // pred_check
          %p433 = pneg %p245
        $region42: #{forward.1} parent=11 // pred_check_branch
          %435 = sbr.rel (%p433) target = $region44
        $region43: #{forward.1} parent=11 // pred_region
          _
        $region44: #{forward.1} parent=11 // pred_fallthru
          _
        // Predicated region
        $region45: #{forward.1} parent=11 // pred_check
          %p436 = pneg %p266
        $region46: #{forward.1} parent=11 // pred_check_branch
          %438 = sbr.rel (%p436) target = $region48
        $region47: #{forward.1} parent=11 // pred_region
          _
        $region48: #{forward.1} parent=11 // pred_fallthru
          _
        // Predicated region
        $region49: #{forward.1} parent=11 // pred_check
          %p439 = pneg %p287
        $region50: #{forward.1} parent=11 // pred_check_branch
          %441 = sbr.rel (%p439) target = $region52
        $region51: #{forward.1} parent=11 // pred_region
          _
        $region52: #{forward.1} parent=11 // pred_fallthru
          _
        // Predicated region
        $region53: #{forward.1} parent=11 // pred_check
          %p442 = pneg %p308
        $region54: #{forward.1} parent=11 // pred_check_branch
          %444 = sbr.rel (%p442) target = $region56
        $region55: #{forward.1} parent=11 // pred_region
          _
        $region56: #{forward.1} parent=11 // pred_fallthru
          _
        // Predicated region
        $region57: #{forward.1} parent=11 // pred_check
          %p445 = pneg %p329
        $region58: #{forward.1} parent=11 // pred_check_branch
          %447 = sbr.rel (%p445) target = $region60
        $region59: #{forward.1} parent=11 // pred_region
          _
        $region60: #{forward.1} parent=11 // pred_fallthru
          _
        // Predicated region
        $region61: #{forward.1} parent=11 // pred_check
          %p448 = pneg %p350
        $region62: #{forward.1} parent=11 // pred_check_branch
          %450 = sbr.rel (%p448) target = $region64
        $region63: #{forward.1} parent=11 // pred_region
          _
        $region64: #{forward.1} parent=11 // pred_fallthru
          _
        // Predicated region
        $region65: #{forward.1} parent=11 // pred_check
          %p451 = pneg %p371
        $region66: #{forward.1} parent=11 // pred_check_branch
          %453 = sbr.rel (%p451) target = $region68
        $region67: #{forward.1} parent=11 // pred_region
          _
        $region68: #{forward.1} parent=11 // pred_fallthru
          _
      $region12: #{forward.1} parent=5 // pred_fallthru
        _
      %p454 = scmp.lt.s32.totalorder %s25, 2
      // Predicated region
      $region69: #{forward.1} parent=5 // pred_check
        %p455 = pneg %p454
      $region70: #{forward.1} parent=5 // pred_check_branch
        %457 = sbr.rel (%p455) target = $region72
      $region71: #{forward.1} parent=5 // pred_region
        // Predicated region
        $region73: #{forward.1} parent=71 // pred_check
          %p458 = pneg %p45
        $region74: #{forward.1} parent=71 // pred_check_branch
          %460 = sbr.rel (%p458) target = $region76
        $region75: #{forward.1} parent=71 // pred_region
          %p461 = scmp.lt.s32.totalorder %s25, 1
          %s462 = scalar_select %p461, %s25, 1
          %s463 = smul.addr %s462, 8
          %s464 = scalar_lea.vmem %s0, %s463
        $region76: #{forward.1} parent=71 // pred_fallthru
          _
        // Predicated region
        $region77: #{forward.1} parent=71 // pred_check
          %p465 = pneg %p71
        $region78: #{forward.1} parent=71 // pred_check_branch
          %467 = sbr.rel (%p465) target = $region80
        $region79: #{forward.1} parent=71 // pred_region
          %p468 = scmp.lt.s32.totalorder %s25, 1
          %s469 = scalar_select %p468, %s25, 1
          %s470 = scalar_lea.vmem %s1, %s469
        $region80: #{forward.1} parent=71 // pred_fallthru
          _
      $region72: #{forward.1} parent=5 // pred_fallthru
        _
      %p471 = scmp.le.s32.totalorder 1, %s25
      %p472 = scmp.lt.s32.totalorder %s25, 3
      %p473 = pnand %p471, %p472
      %p474 = pneg %p473
      // Predicated region
      $region81: #{forward.1} parent=5 // pred_check
        _
      $region82: #{forward.1} parent=5 // pred_check_branch
        %476 = sbr.rel (%p473) target = $region84
      $region83: #{forward.1} parent=5 // pred_region
        %s477 = ssub.s32 %s25, 1
        %p478 = scmp.lt.s32.totalorder %s30, 1
        %s479 = scalar_select %p478, %s30, 1
        %s480 = smul.addr %s479, 8
        %s481 = scalar_lea.vmem %s0, %s480
        %p482 = pneg %p51
        %p483 = pneg %p48
        %p484 = scmp.lt.s32.totalorder %s30, 1
        %s485 = scalar_select %p484, %s30, 1
        %s486 = scalar_lea.vmem %s1, %s485
        %p487 = pneg %p77
        %p488 = pneg %p74
        %p489 = pneg %p98
        %p490 = pneg %p95
        %p491 = pneg %p119
        %p492 = pneg %p116
        %p493 = pneg %p140
        %p494 = pneg %p137
        %p495 = pneg %p161
        %p496 = pneg %p158
        %p497 = pneg %p182
        %p498 = pneg %p179
        %p499 = pneg %p203
        %p500 = pneg %p200
        %p501 = pneg %p224
        %p502 = pneg %p221
        %p503 = pneg %p245
        %p504 = pneg %p242
        %p505 = pneg %p266
        %p506 = pneg %p263
        %p507 = pneg %p287
        %p508 = pneg %p284
        %p509 = pneg %p308
        %p510 = pneg %p305
        %p511 = pneg %p329
        %p512 = pneg %p326
        %p513 = pneg %p350
        %p514 = pneg %p347
        %p515 = pneg %p371
        %p516 = pneg %p368
        %p517 = pneg %p397
        %p518 = pneg %p394
        %s519 = sand.u32 %s384, 1
        %s520 = scalar_lea.sflag [#allocation3], %s519
        %s521 = sand.u32 %s384, 1
        %s522 = smul.addr %s521, 8
        %s523 = scalar_lea.vmem [#allocation2], %s522
        %p524 = scmp.lt.s32.totalorder %s30, 1
        %s525 = scalar_select %p524, %s30, 1
        %s526 = smul.addr %s525, 8
        %s527 = scalar_lea.vmem %s0, %s526
        %p528 = scmp.lt.s32.totalorder %s30, 1
        %s529 = scalar_select %p528, %s30, 1
        %s530 = scalar_lea.vmem %s1, %s529
        %v531 = vld [vmem:[%s527] sm:$0xff]
        %v532 = vld [vmem:[%s2] sm:$0x1]
        %v533 = vld [vmem:[%s3] sm:$0x1]
        %vm534 = vcmask 261120
        %v535 = vsel %vm534, %v531, 0.0
        %536 = vadd.xlane.f32.xlu0 %v535
        %v537 = vpop.xlane.xlu0 %536
        %v538 = vrcp.pop 32.0
        %v539 = vmul.f32 32.0, %v538
        %v540 = vsub.f32 1.0, %v539
        %v541 = vmul.f32 %v538, %v540
        %v542 = vadd.f32 %v538, %v541
        %vm543 = vweird.f32 %v538
        %v544 = vsel %vm543, %v538, %v542
        %v545 = vmul.f32 %v537, %v544
        %v546 = vsub.f32 %v531, %v545
        %v547 = vmul.f32 %v546, %v546
        %v548 = vsel %vm534, %v547, 0.0
        %549 = vadd.xlane.f32.xlu0 %v548
        %v550 = vpop.xlane.xlu0 %549
        %v551 = vmul.f32 %v550, %v544
        %v552 = vadd.f32 %v551, 1e-12
        %v553 = vrsqrt.pop %v552
        %v554 = vmul.f32 %v553, %v552
        %v555 = vmul.f32 %v554, %v553
        %v556 = vmul.f32 0.5, %v555
        %v557 = vsub.f32 1.5, %v556
        %v558 = vmul.f32 %v553, %v557
        %vm559 = vweird.f32 %v552
        %vm560 = vweird.f32 %v553
        %vm561 = vmor %vm559, %vm560
        %v562 = vsel %vm561, %v553, %v558
        %v563 = vmul.f32 %v546, %v562
        %v565 = vperm.slane %v532, 0
        %v567 = vmul.f32 %v563, %v565
        %v569 = vperm.slane %v533, 0
        %v571 = vadd.f32 %v567, %v569
        %v572 = vld [vmem:[%s4] sm:$0xff]
        %v573 = vld [vmem:[%s4 + $0x8] sm:$0xff]
        %v574 = vld [vmem:[%s4 + $0x10] sm:$0xff]
        %v575 = vld [vmem:[%s4 + $0x18] sm:$0xff]
        %v576 = vld [vmem:[%s5] sm:$0x1]
        %v578 = vperm.slane %v576, 0
        %v581 = vsel %vm534, %v571, 0
        %583 = vmatpush.msra.mxu0 0.0
        %584 = vmatpush.msra.mxu0 0.0
        %585 = vmatpush.msra.mxu0 0.0
        %586 = vmatpush.msra.mxu0 0.0
        %587 = vmatpush.msra.mxu0 0.0
        %588 = vmatpush.msra.mxu0 0.0
        %589 = vmatpush.msra.mxu0 0.0
        %590 = vmatpush.msra.mxu0 0.0
        %591 = vmatpush.msra.mxu0 0.0
        %592 = vmatpush.msra.mxu0 0.0
        %593 = vmatpush.msra.mxu0 0.0
        %594 = vmatpush.msra.mxu0 0.0
        %595 = vmatpush.msra.mxu0 %v575
        %596 = vmatpush.msra.mxu0 %v574
        %597 = vmatpush.msra.mxu0 %v573
        %598 = vmatpush.msra.mxu0 %v572
        %599 = vmatmul.f32.gmra.mxu0 %v581
        %v600 = vpop.f32.mrf.mxu0
        %v601 = vadd.f32 %v578, %v600
        %602 = vdwg.mxu0
        %v603 = vld [vmem:[%s530] sm:$0x1]
        %605 = vrot.lane.b32.xlu0 %v601, 96
        %v606 = vpop.permute.xlu0 %605
        %vm607 = vcmask 130048
        %v608 = vsel %vm607, %v601, 0
        %v610 = vsel %vm607, %v606, 0
        %612 = vmatpush.xpose.msra.mxu0 0.0
        %613 = vmatpush.xpose.msra.mxu0 0.0
        %614 = vmatpush.xpose.msra.mxu0 0.0
        %615 = vmatpush.xpose.msra.mxu0 0.0
        %616 = vmatpush.xpose.msra.mxu0 0.0
        %617 = vmatpush.xpose.msra.mxu0 0.0
        %618 = vmatpush.xpose.msra.mxu0 0.0
        %619 = vmatpush.xpose.msra.mxu0 0.0
        %620 = vmatpush.xpose.msra.mxu0 0.0
        %621 = vmatpush.xpose.msra.mxu0 0.0
        %622 = vmatpush.xpose.msra.mxu0 0.0
        %623 = vmatpush.xpose.msra.mxu0 0.0
        %624 = vmatpush.xpose.msra.mxu0 0.0
        %625 = vmatpush.xpose.msra.mxu0 0.0
        %626 = vmatpush.xpose.msra.mxu0 0.0
        %627 = vmatpush.xpose.msra.mxu0 %v610
        %628 = vmatmul.f32.gmra.mxu0 %v608
        %v629 = vpop.f32.mrf.mxu0
        %v630 = vadd.f32 0.0, %v629
        %631 = vdwg.mxu0
        %v632 = vmul.f32 %v630, 0.25
        %v634 = vperm.slane %v603, 0
        %v636 = vadd.f32 %v632, %v634
        %vm637 = vcmask 64512
        %v638 = vsel %vm637, %v636, -inf
        %639 = vmax.xlane.f32.xlu0 %v638
        %v640 = vpop.xlane.xlu0 %639
        %v641 = vsub.f32 %v636, %v640
        %v642 = vmul.f32 %v641, 1.442695
        %v643 = vpow.pop %v642
        %v644 = vsel %vm637, %v643, 0.0
        %645 = vadd.xlane.f32.xlu0 %v644
        %v646 = vpop.xlane.xlu0 %645
        %v647 = vrcp.pop %v646
        %v648 = vmul.f32 %v643, %v647
        %649 = vrot.lane.b32.xlu0 %v601, 64
        %v650 = vpop.permute.xlu0 %649
        %v653 = vsel %vm637, %v648, 0
        %655 = vmatpush.msra.mxu0 0.0
        %656 = vmatpush.msra.mxu0 0.0
        %657 = vmatpush.msra.mxu0 0.0
        %658 = vmatpush.msra.mxu0 0.0
        %659 = vmatpush.msra.mxu0 0.0
        %660 = vmatpush.msra.mxu0 0.0
        %661 = vmatpush.msra.mxu0 0.0
        %662 = vmatpush.msra.mxu0 0.0
        %663 = vmatpush.msra.mxu0 0.0
        %664 = vmatpush.msra.mxu0 0.0
        %665 = vmatpush.msra.mxu0 0.0
        %666 = vmatpush.msra.mxu0 0.0
        %667 = vmatpush.msra.mxu0 0.0
        %668 = vmatpush.msra.mxu0 0.0
        %669 = vmatpush.msra.mxu0 0.0
        %670 = vmatpush.msra.mxu0 %v650
        %671 = vmatmul.f32.gmra.mxu0 %v653
        %v672 = vpop.f32.mrf.mxu0
        %v673 = vadd.f32 0.0, %v672
        %674 = vdwg.mxu0
        %675 = vrot.lane.b32.xlu0 %v601, 112
        %v676 = vpop.permute.xlu0 %675
        %677 = vrot.lane.b32.xlu0 %v601, 80
        %v678 = vpop.permute.xlu0 %677
        %v679 = vsel %vm607, %v676, 0
        %v681 = vsel %vm607, %v678, 0
        %683 = vmatpush.xpose.msra.mxu0 0.0
        %684 = vmatpush.xpose.msra.mxu0 0.0
        %685 = vmatpush.xpose.msra.mxu0 0.0
        %686 = vmatpush.xpose.msra.mxu0 0.0
        %687 = vmatpush.xpose.msra.mxu0 0.0
        %688 = vmatpush.xpose.msra.mxu0 0.0
        %689 = vmatpush.xpose.msra.mxu0 0.0
        %690 = vmatpush.xpose.msra.mxu0 0.0
        %691 = vmatpush.xpose.msra.mxu0 0.0
        %692 = vmatpush.xpose.msra.mxu0 0.0
        %693 = vmatpush.xpose.msra.mxu0 0.0
        %694 = vmatpush.xpose.msra.mxu0 0.0
        %695 = vmatpush.xpose.msra.mxu0 0.0
        %696 = vmatpush.xpose.msra.mxu0 0.0
        %697 = vmatpush.xpose.msra.mxu0 0.0
        %698 = vmatpush.xpose.msra.mxu0 %v681
        %699 = vmatmul.f32.gmra.mxu0 %v679
        %v700 = vpop.f32.mrf.mxu0
        %v701 = vadd.f32 0.0, %v700
        %702 = vdwg.mxu0
        %v703 = vmul.f32 %v701, 0.25
        %v704 = vadd.f32 %v703, %v634
        %v705 = vsel %vm637, %v704, -inf
        %706 = vmax.xlane.f32.xlu0 %v705
        %v707 = vpop.xlane.xlu0 %706
        %v708 = vsub.f32 %v704, %v707
        %v709 = vmul.f32 %v708, 1.442695
        %v710 = vpow.pop %v709
        %v711 = vsel %vm637, %v710, 0.0
        %712 = vadd.xlane.f32.xlu0 %v711
        %v713 = vpop.xlane.xlu0 %712
        %v714 = vrcp.pop %v713
        %v715 = vmul.f32 %v710, %v714
        %716 = vrot.lane.b32.xlu0 %v601, 48
        %v717 = vpop.permute.xlu0 %716
        %v720 = vsel %vm637, %v715, 0
        %722 = vmatpush.msra.mxu0 0.0
        %723 = vmatpush.msra.mxu0 0.0
        %724 = vmatpush.msra.mxu0 0.0
        %725 = vmatpush.msra.mxu0 0.0
        %726 = vmatpush.msra.mxu0 0.0
        %727 = vmatpush.msra.mxu0 0.0
        %728 = vmatpush.msra.mxu0 0.0
        %729 = vmatpush.msra.mxu0 0.0
        %730 = vmatpush.msra.mxu0 0.0
        %731 = vmatpush.msra.mxu0 0.0
        %732 = vmatpush.msra.mxu0 0.0
        %733 = vmatpush.msra.mxu0 0.0
        %734 = vmatpush.msra.mxu0 0.0
        %735 = vmatpush.msra.mxu0 0.0
        %736 = vmatpush.msra.mxu0 0.0
        %737 = vmatpush.msra.mxu0 %v717
        %738 = vmatmul.f32.gmra.mxu0 %v720
        %v739 = vpop.f32.mrf.mxu0
        %v740 = vadd.f32 0.0, %v739
        %741 = vdwg.mxu0
        %743 = vrot.lane.b32.xlu0 %v740, 16
        %v744 = vpop.permute.xlu0 %743
        %v746 = vsel %vm607, %v673, %v744
        %v747 = vld [vmem:[%s6] sm:$0xff]
        %v748 = vld [vmem:[%s6 + $0x8] sm:$0xff]
        %v749 = vld [vmem:[%s6 + $0x10] sm:$0xff]
        %v750 = vld [vmem:[%s6 + $0x18] sm:$0xff]
        %v751 = vld [vmem:[%s7] sm:$0x1]
        %v753 = vperm.slane %v751, 0
        %v756 = vsel %vm534, %v746, 0
        %758 = vmatpush.msra.mxu0 0.0
        %759 = vmatpush.msra.mxu0 0.0
        %760 = vmatpush.msra.mxu0 0.0
        %761 = vmatpush.msra.mxu0 0.0
        %762 = vmatpush.msra.mxu0 0.0
        %763 = vmatpush.msra.mxu0 0.0
        %764 = vmatpush.msra.mxu0 0.0
        %765 = vmatpush.msra.mxu0 0.0
        %766 = vmatpush.msra.mxu0 0.0
        %767 = vmatpush.msra.mxu0 0.0
        %768 = vmatpush.msra.mxu0 0.0
        %769 = vmatpush.msra.mxu0 0.0
        %770 = vmatpush.msra.mxu0 %v750
        %771 = vmatpush.msra.mxu0 %v749
        %772 = vmatpush.msra.mxu0 %v748
        %773 = vmatpush.msra.mxu0 %v747
        %774 = vmatmul.f32.gmra.mxu0 %v756
        %v775 = vpop.f32.mrf.mxu0
        %v776 = vadd.f32 %v753, %v775
        %777 = vdwg.mxu0
        %v778 = vadd.f32 %v571, %v776
        %v779 = vld [vmem:[%s8] sm:$0x1]
        %v780 = vld [vmem:[%s9] sm:$0x1]
        %v781 = vsel %vm534, %v778, 0.0
        %782 = vadd.xlane.f32.xlu0 %v781
        %v783 = vpop.xlane.xlu0 %782
        %v784 = vmul.f32 %v783, %v544
        %v785 = vsub.f32 %v778, %v784
        %v786 = vmul.f32 %v785, %v785
        %v787 = vsel %vm534, %v786, 0.0
        %788 = vadd.xlane.f32.xlu0 %v787
        %v789 = vpop.xlane.xlu0 %788
        %v790 = vmul.f32 %v789, %v544
        %v791 = vadd.f32 %v790, 1e-12
        %v792 = vrsqrt.pop %v791
        %v793 = vmul.f32 %v792, %v791
        %v794 = vmul.f32 %v793, %v792
        %v795 = vmul.f32 0.5, %v794
        %v796 = vsub.f32 1.5, %v795
        %v797 = vmul.f32 %v792, %v796
        %vm798 = vweird.f32 %v791
        %vm799 = vweird.f32 %v792
        %vm800 = vmor %vm798, %vm799
        %v801 = vsel %vm800, %v792, %v797
        %v802 = vmul.f32 %v785, %v801
        %v804 = vperm.slane %v779, 0
        %v806 = vmul.f32 %v802, %v804
        %v808 = vperm.slane %v780, 0
        %v810 = vadd.f32 %v806, %v808
        %v811 = vld [vmem:[%s10] sm:$0xff]
        %v812 = vld [vmem:[%s10 + $0x8] sm:$0xff]
        %v813 = vld [vmem:[%s10 + $0x10] sm:$0xff]
        %v814 = vld [vmem:[%s10 + $0x18] sm:$0xff]
        %v815 = vld [vmem:[%s11] sm:$0x1]
        %v817 = vperm.slane %v815, 0
        %v820 = vsel %vm534, %v810, 0
        %822 = vmatpush.msra.mxu0 0.0
        %823 = vmatpush.msra.mxu0 0.0
        %824 = vmatpush.msra.mxu0 0.0
        %825 = vmatpush.msra.mxu0 0.0
        %826 = vmatpush.msra.mxu0 0.0
        %827 = vmatpush.msra.mxu0 0.0
        %828 = vmatpush.msra.mxu0 0.0
        %829 = vmatpush.msra.mxu0 0.0
        %830 = vmatpush.msra.mxu0 0.0
        %831 = vmatpush.msra.mxu0 0.0
        %832 = vmatpush.msra.mxu0 0.0
        %833 = vmatpush.msra.mxu0 0.0
        %834 = vmatpush.msra.mxu0 %v814
        %835 = vmatpush.msra.mxu0 %v813
        %836 = vmatpush.msra.mxu0 %v812
        %837 = vmatpush.msra.mxu0 %v811
        %838 = vmatmul.f32.gmra.mxu0 %v820
        %v839 = vpop.f32.mrf.mxu0
        %v840 = vadd.f32 %v817, %v839
        %841 = vdwg.mxu0
        %v842 = vmul.f32 %v840, 0.5
        %v843 = vmul.f32 %v840, 0.70710677
        %vm844 = vcmp.lt.f32.partialorder %v843, 0.0
        %v845 = vsel %vm844, -1.0, 1.0
        %v846 = vand.u32 2147483647, %v843
        %v847 = vmul.f32 %v846, 0.3275911
        %v848 = vadd.f32 %v847, 1.0
        %v849 = vrcp.pop %v848
        %v850 = vmul.f32 %v848, %v849
        %v851 = vsub.f32 1.0, %v850
        %v852 = vmul.f32 %v849, %v851
        %v853 = vadd.f32 %v849, %v852
        %vm854 = vweird.f32 %v848
        %vm855 = vweird.f32 %v849
        %vm856 = vmor %vm854, %vm855
        %v857 = vsel %vm856, %v849, %v853
        %v858 = vand.u32 2147483647, %v848
        %vm859 = vcmp.eq.f32.partialorder %v858, 8.507059e+37
        %v860 = vand.u32 %v848, 2147483648
        %v861 = vor.u32 1.1754944e-38, %v860
        %v862 = vsel %vm859, %v861, %v857
        %v863 = vmul.f32 1.0, %v862
        %v864 = vmul.f32 %v863, 1.0614054
        %v865 = vadd.f32 %v864, -1.4531521
        %v866 = vmul.f32 %v865, %v863
        %v867 = vadd.f32 %v866, 1.4214138
        %v868 = vmul.f32 %v867, %v863
        %v869 = vadd.f32 %v868, -0.28449672
        %v870 = vmul.f32 %v869, %v863
        %v871 = vadd.f32 %v870, 0.2548296
        %v872 = vmul.f32 %v871, %v863
        %v873 = vsub.f32 0.0, %v846
        %v874 = vmul.f32 %v873, %v846
        %v875 = vmul.f32 %v874, 1.442695
        %v876 = vpow.pop %v875
        %v877 = vmul.f32 %v872, %v876
        %v878 = vsub.f32 1.0, %v877
        %v879 = vmul.f32 %v845, %v878
        %v880 = vadd.f32 %v879, 1.0
        %v881 = vmul.f32 %v842, %v880
        %v882 = vld [vmem:[%s12] sm:$0xff]
        %v883 = vld [vmem:[%s12 + $0x8] sm:$0xff]
        %v884 = vld [vmem:[%s12 + $0x10] sm:$0xff]
        %v885 = vld [vmem:[%s12 + $0x18] sm:$0xff]
        %v886 = vld [vmem:[%s12 + $0x20] sm:$0xff]
        %v887 = vld [vmem:[%s12 + $0x28] sm:$0xff]
        %v888 = vld [vmem:[%s12 + $0x30] sm:$0xff]
        %v889 = vld [vmem:[%s12 + $0x38] sm:$0xff]
        %v890 = vld [vmem:[%s13] sm:$0x1]
        %v892 = vperm.slane %v890, 0
        %vm894 = vcmask 523264
        %v896 = vsel %vm894, %v881, 0
        %898 = vmatpush.msra.mxu0 0.0
        %899 = vmatpush.msra.mxu0 0.0
        %900 = vmatpush.msra.mxu0 0.0
        %901 = vmatpush.msra.mxu0 0.0
        %902 = vmatpush.msra.mxu0 0.0
        %903 = vmatpush.msra.mxu0 0.0
        %904 = vmatpush.msra.mxu0 0.0
        %905 = vmatpush.msra.mxu0 0.0
        %906 = vmatpush.msra.mxu0 %v889
        %907 = vmatpush.msra.mxu0 %v888
        %908 = vmatpush.msra.mxu0 %v887
        %909 = vmatpush.msra.mxu0 %v886
        %910 = vmatpush.msra.mxu0 %v885
        %911 = vmatpush.msra.mxu0 %v884
        %912 = vmatpush.msra.mxu0 %v883
        %913 = vmatpush.msra.mxu0 %v882
        %914 = vmatmul.f32.gmra.mxu0 %v896
        %v915 = vpop.f32.mrf.mxu0
        %v916 = vadd.f32 %v892, %v915
        %917 = vdwg.mxu0
        %v918 = vadd.f32 %v810, %v916
        %v919 = vld [vmem:[%s14] sm:$0x1]
        %v920 = vld [vmem:[%s15] sm:$0x1]
        %v921 = vsel %vm534, %v918, 0.0
        %922 = vadd.xlane.f32.xlu0 %v921
        %v923 = vpop.xlane.xlu0 %922
        %v924 = vmul.f32 %v923, %v544
        %v925 = vsub.f32 %v918, %v924
        %v926 = vmul.f32 %v925, %v925
        %v927 = vsel %vm534, %v926, 0.0
        %928 = vadd.xlane.f32.xlu0 %v927
        %v929 = vpop.xlane.xlu0 %928
        %v930 = vmul.f32 %v929, %v544
        %v931 = vadd.f32 %v930, 1e-12
        %v932 = vrsqrt.pop %v931
        %v933 = vmul.f32 %v932, %v931
        %v934 = vmul.f32 %v933, %v932
        %v935 = vmul.f32 0.5, %v934
        %v936 = vsub.f32 1.5, %v935
        %v937 = vmul.f32 %v932, %v936
        %vm938 = vweird.f32 %v931
        %vm939 = vweird.f32 %v932
        %vm940 = vmor %vm938, %vm939
        %v941 = vsel %vm940, %v932, %v937
        %v942 = vmul.f32 %v925, %v941
        %v944 = vperm.slane %v919, 0
        %v946 = vmul.f32 %v942, %v944
        %v948 = vperm.slane %v920, 0
        %v950 = vadd.f32 %v946, %v948
        %951 = vst.msk [vmem:[%s523] sm:$0xff] %vm534, %v950
        %s952 = sand.u32 %s384, 1
        %s953 = scalar_lea.sflag [#allocation3], %s952
        %s954 = sand.u32 %s384, 1
        %s955 = smul.addr %s954, 8
        %s956 = scalar_lea.vmem [#allocation2], %s955
        // Predicated region
        $region85: #{forward.1} parent=83 // pred_check
          %p957 = pneg %p394
        $region86: #{forward.1} parent=83 // pred_check_branch
          %959 = sbr.rel (%p957) target = $region88
        $region87: #{forward.1} parent=83 // pred_region
          %961 = vsyncadd %s953, 0
          %s962 = smul.addr %s30, 8
          %s963 = scalar_lea.hbm %s16, %s962
          %s965 = sshll.u32 %s956, 4
          %s966 = int_to_ptr.vmem [resolvable:$true] %s965
          %s967 = sshll.u32 %s963, 4
          %s968 = int_to_ptr.hbm [resolvable:$true] %s967
          %970 = dma.vmem_to_hbm [thread:$0]  %s966, 128, %s968, %s953
        $region88: #{forward.1} parent=83 // pred_fallthru
          _
      $region84: #{forward.1} parent=5 // pred_fallthru
        _
      %p971 = scmp.le.s32.totalorder 2, %s25
      // Predicated region
      $region89: #{forward.1} parent=5 // pred_check
        %p972 = pneg %p971
      $region90: #{forward.1} parent=5 // pred_check_branch
        %974 = sbr.rel (%p972) target = $region92
      $region91: #{forward.1} parent=5 // pred_region
        %s975 = ssub.s32 %s25, 2
        // Predicated region
        $region93: #{forward.1} parent=91 // pred_check
          %p976 = pneg %p400
        $region94: #{forward.1} parent=91 // pred_check_branch
          %978 = sbr.rel (%p976) target = $region96
        $region95: #{forward.1} parent=91 // pred_region
          %s979 = sand.u32 %s385, 1
          %s980 = scalar_lea.sflag [#allocation3], %s979
          %s981 = sand.u32 %s385, 1
          %s982 = smul.addr %s981, 8
          %s983 = scalar_lea.vmem [#allocation2], %s982
          %985 = dma.done %s980, 128
        $region96: #{forward.1} parent=91 // pred_fallthru
          _
      $region92: #{forward.1} parent=5 // pred_fallthru
        _
    $region6: #{forward.1} parent=1 // loop_footer
      %s29 = sadd.s32 1, %s25
    $region7: #{forward.1} parent=1 // loop_footer_branch
      %24 = sbr.rel target = $region3
    $region8: #{forward.1} parent=1 // loop_exit
      _
    %986 = vsyncpa [#allocation3], 1
    %s987 = scalar_lea.sflag [#allocation3], 1
    %988 = vsyncpa %s987, 1

</llo_original>
